<compile_context>
chip_gen: v7x
topology: tpu7x:2x2x1
jax: 0.10.0
libtpu: 0.0.40
codegen_flags: <defaults>
</compile_context>

<pallas_src>
import functools

import jax
import jax.numpy as jnp
from jax.experimental import pallas as pl
from jax.experimental.pallas import tpu as pltpu


def _decoder_kernel(x_ref,
                    w1_ref, b1_ref,
                    w2_ref, b2_ref,
                    w3_ref, b3_ref,
                    w4_ref, b4_ref,
                    out_ref):
    cdt = w1_ref.dtype  # bf16 compute dtype for MXU operands

    x = x_ref[...].astype(cdt)

    # fc1 + ReLU   (bf16 x bf16 -> f32 accumulate, f32 bias add)
    h = jnp.dot(x, w1_ref[...], preferred_element_type=jnp.float32) + b1_ref[...]
    h = jnp.maximum(h, 0.0).astype(cdt)

    # fc2 + ReLU
    h = jnp.dot(h, w2_ref[...], preferred_element_type=jnp.float32) + b2_ref[...]
    h = jnp.maximum(h, 0.0).astype(cdt)

    # fc3 + ReLU
    h = jnp.dot(h, w3_ref[...], preferred_element_type=jnp.float32) + b3_ref[...]
    h = jnp.maximum(h, 0.0).astype(cdt)

    # fc4 (no activation); single cast at the final (lane-dense) store.
    y = jnp.dot(h, w4_ref[...], preferred_element_type=jnp.float32) + b4_ref[...]
    out_ref[...] = y.astype(out_ref.dtype)


def _round_up(n, m):
    return ((n + m - 1) // m) * m


@functools.partial(jax.jit, static_argnames=("block_m",))
def decoder_forward(x, params, *, block_m=512):
    """Fused 4-layer MLP decoder as a single Pallas kernel with a batch grid.

    x: (batch, latent_size) float32
    params: dict with w1..w4 as (in, out) f32 and b1..b4 as (1, out) f32
    returns: (batch, output_size) float32
    """
    batch, latent = x.shape
    hidden = params["w1"].shape[1]
    out_features = params["w4"].shape[1]

    # ---- Lane-dense feature dims (multiples of 128); zero-padded => exact. ----
    hid_p = _round_up(hidden, 128)
    out_p = _round_up(out_features, 128)

    cdt = jnp.bfloat16

    def pad2(a, rows, cols, dtype):
        r, c = a.shape
        return jnp.pad(a, ((0, rows - r), (0, cols - c))).astype(dtype)

    w1 = pad2(params["w1"], latent, hid_p, cdt)
    w2 = pad2(params["w2"], hid_p, hid_p, cdt)
    w3 = pad2(params["w3"], hid_p, hid_p, cdt)
    w4 = pad2(params["w4"], hid_p, out_p, cdt)
    b1 = pad2(params["b1"], 1, hid_p, jnp.float32)
    b2 = pad2(params["b2"], 1, hid_p, jnp.float32)
    b3 = pad2(params["b3"], 1, hid_p, jnp.float32)
    b4 = pad2(params["b4"], 1, out_p, jnp.float32)

    # ---- Batch: pad only to an 8-sublane multiple; grid handles ragged tiles. ----
    batch_p = _round_up(batch, 8)
    if batch_p != batch:
        x = jnp.pad(x, ((0, batch_p - batch), (0, 0)))

    tm = min(_round_up(block_m, 8), batch_p)
    grid = (pl.cdiv(batch_p, tm),)

    # x / out walk the batch axis; weights & biases use a constant index map
    # (full-array block, same block every step) so they are DMA'd once and
    # remain VMEM-resident across the whole grid.
    x_spec = pl.BlockSpec((tm, latent), lambda i: (i, 0))
    out_spec = pl.BlockSpec((tm, out_p), lambda i: (i, 0))

    def resident(shape):
        return pl.BlockSpec(shape, lambda i: (0, 0))

    in_specs = [
        x_spec,
        resident((latent, hid_p)), resident((1, hid_p)),   # fc1
        resident((hid_p, hid_p)),  resident((1, hid_p)),   # fc2
        resident((hid_p, hid_p)),  resident((1, hid_p)),   # fc3
        resident((hid_p, out_p)),  resident((1, out_p)),   # fc4
    ]

    # ---- VMEM budget & cost estimate (all static Python ints under jit). ----
    weight_bytes = sum(int(a.size) * a.dtype.itemsize
                       for a in (w1, b1, w2, b2, w3, b3, w4, b4))
    io_bytes = 2 * (tm * latent * 4 + tm * out_p * 4)        # double-buffered x/out tiles
    act_bytes = 4 * tm * (latent + 3 * hid_p + out_p)        # f32 intermediates (upper bound)
    # Default pipelining double-buffers even grid-invariant inputs -> budget 2x
    # weights.  TODO(synk): single-buffer / K-tile weights for v7x at large hidden.
    footprint = 2 * weight_bytes + io_bytes + act_bytes
    vmem_limit = int(min(64 * 2 ** 20, max(32 * 2 ** 20, footprint * 5 // 4)))

    flops = 2 * batch_p * (latent * hid_p + 2 * hid_p * hid_p + hid_p * out_p)
    bytes_accessed = (batch_p * latent * 4 + weight_bytes + batch_p * out_p * 4)
    cost = pl.CostEstimate(flops=flops, transcendentals=0,
                           bytes_accessed=bytes_accessed)

    out = pl.pallas_call(
        _decoder_kernel,
        out_shape=jax.ShapeDtypeStruct((batch_p, out_p), jnp.float32),
        grid=grid,
        in_specs=in_specs,
        out_specs=out_spec,
        compiler_params=pltpu.CompilerParams(
            dimension_semantics=("parallel",),
            vmem_limit_bytes=vmem_limit,
        ),
        cost_estimate=cost,
    )(
        x,
        w1, b1,
        w2, b2,
        w3, b3,
        w4, b4,
    )

    # Slice off lane padding (and batch padding, if any).
    return out[:batch, :out_features]


def init_params(key, output_size, hidden_size, latent_size):
    """Deterministic synthetic parameters matching Decoder.__init__ shapes.

    PyTorch nn.Linear(in, out) stores weight as (out, in); we keep the
    transpose (in, out) so the kernel computes x @ W + b directly.
    """
    keys = jax.random.split(key, 8)
    dims = [(latent_size, hidden_size),
            (hidden_size, hidden_size),
            (hidden_size, hidden_size),
            (hidden_size, output_size)]
    params = {}
    for i, (din, dout) in enumerate(dims, start=1):
        scale = 1.0 / jnp.sqrt(jnp.float32(din))
        params[f"w{i}"] = jax.random.uniform(
            keys[2 * (i - 1)], (din, dout), jnp.float32, -scale, scale)
        params[f"b{i}"] = jax.random.uniform(
            keys[2 * (i - 1) + 1], (1, dout), jnp.float32, -scale, scale)
    return params


def decoder_reference(x, params, compute_dtype=jnp.float32):
    """Plain-JAX reference (optionally mimicking the bf16 compute regime)."""
    def lin(h, w, b):
        return jnp.dot(h.astype(compute_dtype), w.astype(compute_dtype),
                       preferred_element_type=jnp.float32) + b
    h = jnp.maximum(lin(x, params["w1"], params["b1"]), 0.0)
    h = jnp.maximum(lin(h, params["w2"], params["b2"]), 0.0)
    h = jnp.maximum(lin(h, params["w3"], params["b3"]), 0.0)
    return lin(h, params["w4"], params["b4"])


if __name__ == "__main__":
    # Small, module-consistent sizes.  batch=64 runs the single-tile path;
    # batch=37 with block_m=16 exercises the multi-step / ragged-last-tile path.
    batch, latent_size, hidden_size, output_size = 64, 16, 32, 64

    key = jax.random.PRNGKey(0)
    pkey, xkey = jax.random.split(key)
    params = init_params(pkey, output_size, hidden_size, latent_size)
    x = jax.random.normal(xkey, (batch, latent_size), jnp.float32)

    out = jax.block_until_ready(decoder_forward(x, params))
    assert out.shape == (batch, output_size)

    ref_bf16 = decoder_reference(x, params, jnp.bfloat16)  # same compute regime
    ref_f32 = decoder_reference(x, params)                  # true f32 semantics
    assert jnp.allclose(out, ref_bf16, atol=1e-2, rtol=1e-2)
    assert jnp.allclose(out, ref_f32, atol=5e-2, rtol=5e-2)

    # Ragged batch + multi-step batch grid (tm=16 -> 3 grid steps over 40 rows).
    x_odd = x[:37]
    out_odd = jax.block_until_ready(decoder_forward(x_odd, params, block_m=16))
    assert out_odd.shape == (37, output_size)
    assert jnp.allclose(out_odd, decoder_reference(x_odd, params, jnp.bfloat16),
                        atol=1e-2, rtol=1e-2)
    assert jnp.allclose(out_odd, decoder_reference(x_odd, params),
                        atol=5e-2, rtol=5e-2)

    print("KERNEL_OK")
</pallas_src>

<mosaic_0001>
module attributes {stable_mosaic.version = 11 : i64} {
  func.func @_decoder_kernel(%arg0: i32, %arg1: memref<64x16xf32, #tpu.memory_space<vmem>>, %arg2: memref<16x128xbf16, #tpu.memory_space<vmem>>, %arg3: memref<1x128xf32, #tpu.memory_space<vmem>>, %arg4: memref<128x128xbf16, #tpu.memory_space<vmem>>, %arg5: memref<1x128xf32, #tpu.memory_space<vmem>>, %arg6: memref<128x128xbf16, #tpu.memory_space<vmem>>, %arg7: memref<1x128xf32, #tpu.memory_space<vmem>>, %arg8: memref<128x128xbf16, #tpu.memory_space<vmem>>, %arg9: memref<1x128xf32, #tpu.memory_space<vmem>>, %arg10: memref<64x128xf32, #tpu.memory_space<vmem>>) attributes {dimension_semantics = [#tpu.dimension_semantics<parallel>], iteration_bounds = array<i64: 1>, scalar_prefetch = 0 : i64, scratch_operands = 0 : i64, tpu.core_type = #tpu.core_type<tc>, window_params = [{transform_indices = @transform_0, window_bounds = array<i64: 64, 16>}, {pipeline_mode = #tpu.pipeline_mode<synchronous>, transform_indices = @transform_1, window_bounds = array<i64: 16, 128>}, {pipeline_mode = #tpu.pipeline_mode<synchronous>, transform_indices = @transform_2, window_bounds = array<i64: 1, 128>}, {pipeline_mode = #tpu.pipeline_mode<synchronous>, transform_indices = @transform_3, window_bounds = array<i64: 128, 128>}, {pipeline_mode = #tpu.pipeline_mode<synchronous>, transform_indices = @transform_4, window_bounds = array<i64: 1, 128>}, {pipeline_mode = #tpu.pipeline_mode<synchronous>, transform_indices = @transform_5, window_bounds = array<i64: 128, 128>}, {pipeline_mode = #tpu.pipeline_mode<synchronous>, transform_indices = @transform_6, window_bounds = array<i64: 1, 128>}, {pipeline_mode = #tpu.pipeline_mode<synchronous>, transform_indices = @transform_7, window_bounds = array<i64: 128, 128>}, {pipeline_mode = #tpu.pipeline_mode<synchronous>, transform_indices = @transform_8, window_bounds = array<i64: 1, 128>}, {transform_indices = @transform_9, window_bounds = array<i64: 64, 128>}]} {
    %c0 = arith.constant 0 : index
    %c0_0 = arith.constant 0 : index
    %0 = vector.load %arg1[%c0, %c0_0] : memref<64x16xf32, #tpu.memory_space<vmem>>, vector<64x16xf32>
    %1 = arith.truncf %0 : vector<64x16xf32> to vector<64x16xbf16>
    %c0_1 = arith.constant 0 : index
    %c0_2 = arith.constant 0 : index
    %2 = vector.load %arg2[%c0_1, %c0_2] : memref<16x128xbf16, #tpu.memory_space<vmem>>, vector<16x128xbf16>
    %cst = arith.constant dense<0.000000e+00> : vector<64x128xf32>
    %3 = tpu.matmul %1, %2, %cst {dimension_numbers = #tpu.dot_dimension_numbers<[1], [0], [0], [1], [0, 0, 1, 1], [], []>} : vector<64x16xbf16>, vector<16x128xbf16>, vector<64x128xf32> -> vector<64x128xf32>
    %c0_3 = arith.constant 0 : index
    %c0_4 = arith.constant 0 : index
    %4 = vector.load %arg3[%c0_3, %c0_4] : memref<1x128xf32, #tpu.memory_space<vmem>>, vector<1x128xf32>
    %5 = vector.broadcast %4 : vector<1x128xf32> to vector<64x128xf32>
    %6 = arith.addf %3, %5 : vector<64x128xf32>
    %cst_5 = arith.constant 0.000000e+00 : f32
    %7 = vector.broadcast %cst_5 : f32 to vector<64x128xf32>
    %8 = arith.maximumf %6, %7 : vector<64x128xf32>
    %9 = arith.truncf %8 : vector<64x128xf32> to vector<64x128xbf16>
    %c0_6 = arith.constant 0 : index
    %c0_7 = arith.constant 0 : index
    %10 = vector.load %arg4[%c0_6, %c0_7] : memref<128x128xbf16, #tpu.memory_space<vmem>>, vector<128x128xbf16>
    %cst_8 = arith.constant dense<0.000000e+00> : vector<64x128xf32>
    %11 = tpu.matmul %9, %10, %cst_8 {dimension_numbers = #tpu.dot_dimension_numbers<[1], [0], [0], [1], [0, 0, 1, 1], [], []>} : vector<64x128xbf16>, vector<128x128xbf16>, vector<64x128xf32> -> vector<64x128xf32>
    %c0_9 = arith.constant 0 : index
    %c0_10 = arith.constant 0 : index
    %12 = vector.load %arg5[%c0_9, %c0_10] : memref<1x128xf32, #tpu.memory_space<vmem>>, vector<1x128xf32>
    %13 = vector.broadcast %12 : vector<1x128xf32> to vector<64x128xf32>
    %14 = arith.addf %11, %13 : vector<64x128xf32>
    %cst_11 = arith.constant 0.000000e+00 : f32
    %15 = vector.broadcast %cst_11 : f32 to vector<64x128xf32>
    %16 = arith.maximumf %14, %15 : vector<64x128xf32>
    %17 = arith.truncf %16 : vector<64x128xf32> to vector<64x128xbf16>
    %c0_12 = arith.constant 0 : index
    %c0_13 = arith.constant 0 : index
    %18 = vector.load %arg6[%c0_12, %c0_13] : memref<128x128xbf16, #tpu.memory_space<vmem>>, vector<128x128xbf16>
    %cst_14 = arith.constant dense<0.000000e+00> : vector<64x128xf32>
    %19 = tpu.matmul %17, %18, %cst_14 {dimension_numbers = #tpu.dot_dimension_numbers<[1], [0], [0], [1], [0, 0, 1, 1], [], []>} : vector<64x128xbf16>, vector<128x128xbf16>, vector<64x128xf32> -> vector<64x128xf32>
    %c0_15 = arith.constant 0 : index
    %c0_16 = arith.constant 0 : index
    %20 = vector.load %arg7[%c0_15, %c0_16] : memref<1x128xf32, #tpu.memory_space<vmem>>, vector<1x128xf32>
    %21 = vector.broadcast %20 : vector<1x128xf32> to vector<64x128xf32>
    %22 = arith.addf %19, %21 : vector<64x128xf32>
    %cst_17 = arith.constant 0.000000e+00 : f32
    %23 = vector.broadcast %cst_17 : f32 to vector<64x128xf32>
    %24 = arith.maximumf %22, %23 : vector<64x128xf32>
    %25 = arith.truncf %24 : vector<64x128xf32> to vector<64x128xbf16>
    %c0_18 = arith.constant 0 : index
    %c0_19 = arith.constant 0 : index
    %26 = vector.load %arg8[%c0_18, %c0_19] : memref<128x128xbf16, #tpu.memory_space<vmem>>, vector<128x128xbf16>
    %cst_20 = arith.constant dense<0.000000e+00> : vector<64x128xf32>
    %27 = tpu.matmul %25, %26, %cst_20 {dimension_numbers = #tpu.dot_dimension_numbers<[1], [0], [0], [1], [0, 0, 1, 1], [], []>} : vector<64x128xbf16>, vector<128x128xbf16>, vector<64x128xf32> -> vector<64x128xf32>
    %c0_21 = arith.constant 0 : index
    %c0_22 = arith.constant 0 : index
    %28 = vector.load %arg9[%c0_21, %c0_22] : memref<1x128xf32, #tpu.memory_space<vmem>>, vector<1x128xf32>
    %29 = vector.broadcast %28 : vector<1x128xf32> to vector<64x128xf32>
    %30 = arith.addf %27, %29 : vector<64x128xf32>
    %c0_23 = arith.constant 0 : index
    %c0_24 = arith.constant 0 : index
    %31 = vector.load %arg10[%c0_23, %c0_24] : memref<64x128xf32, #tpu.memory_space<vmem>>, vector<64x128xf32>
    tpu.vector_store %arg10[%c0_23, %c0_24], %30 {strides = array<i32>} : memref<64x128xf32, #tpu.memory_space<vmem>>, vector<64x128xf32>,
    return
  }
  func.func @transform_0(%arg0: i32) -> (i32, i32) {
    %c0_i32 = arith.constant 0 : i32
    %c0_i32_0 = arith.constant 0 : i32
    return %arg0, %c0_i32 : i32, i32
  }
  func.func @transform_1(%arg0: i32) -> (i32, i32) {
    %c0_i32 = arith.constant 0 : i32
    %c0_i32_0 = arith.constant 0 : i32
    %c0_i32_1 = arith.constant 0 : i32
    return %c0_i32, %c0_i32_0 : i32, i32
  }
  func.func @transform_2(%arg0: i32) -> (i32, i32) {
    %c0_i32 = arith.constant 0 : i32
    %c0_i32_0 = arith.constant 0 : i32
    %c0_i32_1 = arith.constant 0 : i32
    return %c0_i32, %c0_i32_0 : i32, i32
  }
  func.func @transform_3(%arg0: i32) -> (i32, i32) {
    %c0_i32 = arith.constant 0 : i32
    %c0_i32_0 = arith.constant 0 : i32
    %c0_i32_1 = arith.constant 0 : i32
    return %c0_i32, %c0_i32_0 : i32, i32
  }
  func.func @transform_4(%arg0: i32) -> (i32, i32) {
    %c0_i32 = arith.constant 0 : i32
    %c0_i32_0 = arith.constant 0 : i32
    %c0_i32_1 = arith.constant 0 : i32
    return %c0_i32, %c0_i32_0 : i32, i32
  }
  func.func @transform_5(%arg0: i32) -> (i32, i32) {
    %c0_i32 = arith.constant 0 : i32
    %c0_i32_0 = arith.constant 0 : i32
    %c0_i32_1 = arith.constant 0 : i32
    return %c0_i32, %c0_i32_0 : i32, i32
  }
  func.func @transform_6(%arg0: i32) -> (i32, i32) {
    %c0_i32 = arith.constant 0 : i32
    %c0_i32_0 = arith.constant 0 : i32
    %c0_i32_1 = arith.constant 0 : i32
    return %c0_i32, %c0_i32_0 : i32, i32
  }
  func.func @transform_7(%arg0: i32) -> (i32, i32) {
    %c0_i32 = arith.constant 0 : i32
    %c0_i32_0 = arith.constant 0 : i32
    %c0_i32_1 = arith.constant 0 : i32
    return %c0_i32, %c0_i32_0 : i32, i32
  }
  func.func @transform_8(%arg0: i32) -> (i32, i32) {
    %c0_i32 = arith.constant 0 : i32
    %c0_i32_0 = arith.constant 0 : i32
    %c0_i32_1 = arith.constant 0 : i32
    return %c0_i32, %c0_i32_0 : i32, i32
  }
  func.func @transform_9(%arg0: i32) -> (i32, i32) {
    %c0_i32 = arith.constant 0 : i32
    %c0_i32_0 = arith.constant 0 : i32
    return %arg0, %c0_i32 : i32, i32
  }
}

</mosaic_0001>

<llo_original>
// kernel: decoder_forward.1
$region0: #{decoder_forward.1}
  #allocation0 [shape = 'u32[]', space=smem, size = 0x4, offset = 0x4, fixed_abs, tag = 'smem constant byte address 0x4 - core index']
  #allocation1 [shape = 'u32[144,128]{1,0:T(1,128)}', space=vmem, size = 0x12000, scoped, tag = 'internal scratch']
  %s0 = inlined_call_operand.vmem [shape: f32[64,16], index: 0, kind: input, shape index: {}]
  %s1 = inlined_call_operand.vmem [shape: bf16[16,128], index: 1, kind: input, shape index: {}]
  %s2 = inlined_call_operand.vmem [shape: f32[1,128], index: 2, kind: input, shape index: {}]
  %s3 = inlined_call_operand.vmem [shape: bf16[128,128], index: 3, kind: input, shape index: {}]
  %s4 = inlined_call_operand.vmem [shape: f32[1,128], index: 4, kind: input, shape index: {}]
  %s5 = inlined_call_operand.vmem [shape: bf16[128,128], index: 5, kind: input, shape index: {}]
  %s6 = inlined_call_operand.vmem [shape: f32[1,128], index: 6, kind: input, shape index: {}]
  %s7 = inlined_call_operand.vmem [shape: bf16[128,128], index: 7, kind: input, shape index: {}]
  %s8 = inlined_call_operand.vmem [shape: f32[1,128], index: 8, kind: input, shape index: {}]
  %s9 = inlined_call_operand.hbm [shape: f32[64,128], index: 9, kind: output, shape index: {}]
  %s10 = sld [smem:[#allocation0]]
  $region46: #{decoder_forward.1} parent=0
    _
  %s12 = ssub.s32 1, %s10
  %s13 = scalar_select 0, %s12, %s10
  $region1: #{decoder_forward.1} parent=0
    #allocation2 [shape = 'u8[32768]{0}', space=vmem, size = 0x8000, scoped, tag = 'output window, operand 0, single buffered']
    #allocation3 [shape = 's32[1]{0}', space=sflag, size = 0x4, scoped, tag = 'scoped memory for decoder_forward.1']
    %14 = vsyncpa [#allocation3], 0
    // Predicated region
    $region2: #{decoder_forward.1} parent=1 // pred_check
      _
    $region3: #{decoder_forward.1} parent=1 // pred_check_branch
      %16 = sbr.rel (0) target = $region5
    $region4: #{decoder_forward.1} parent=1 // pred_region
      _
    $region5: #{decoder_forward.1} parent=1 // pred_fallthru
      _
    // Predicated region
    $region6: #{decoder_forward.1} parent=1 // pred_check
      _
    $region7: #{decoder_forward.1} parent=1 // pred_check_branch
      %18 = sbr.rel (0) target = $region9
    $region8: #{decoder_forward.1} parent=1 // pred_region
      _
    $region9: #{decoder_forward.1} parent=1 // pred_fallthru
      _
    // Predicated region
    $region10: #{decoder_forward.1} parent=1 // pred_check
      _
    $region11: #{decoder_forward.1} parent=1 // pred_check_branch
      %20 = sbr.rel (0) target = $region13
    $region12: #{decoder_forward.1} parent=1 // pred_region
      _
    $region13: #{decoder_forward.1} parent=1 // pred_fallthru
      _
    // Predicated region
    $region14: #{decoder_forward.1} parent=1 // pred_check
      _
    $region15: #{decoder_forward.1} parent=1 // pred_check_branch
      %22 = sbr.rel (0) target = $region17
    $region16: #{decoder_forward.1} parent=1 // pred_region
      _
    $region17: #{decoder_forward.1} parent=1 // pred_fallthru
      _
    // Predicated region
    $region18: #{decoder_forward.1} parent=1 // pred_check
      _
    $region19: #{decoder_forward.1} parent=1 // pred_check_branch
      %24 = sbr.rel (0) target = $region21
    $region20: #{decoder_forward.1} parent=1 // pred_region
      _
    $region21: #{decoder_forward.1} parent=1 // pred_fallthru
      _
    // Predicated region
    $region22: #{decoder_forward.1} parent=1 // pred_check
      _
    $region23: #{decoder_forward.1} parent=1 // pred_check_branch
      %26 = sbr.rel (0) target = $region25
    $region24: #{decoder_forward.1} parent=1 // pred_region
      _
    $region25: #{decoder_forward.1} parent=1 // pred_fallthru
      _
    // Predicated region
    $region26: #{decoder_forward.1} parent=1 // pred_check
      _
    $region27: #{decoder_forward.1} parent=1 // pred_check_branch
      %28 = sbr.rel (0) target = $region29
    $region28: #{decoder_forward.1} parent=1 // pred_region
      _
    $region29: #{decoder_forward.1} parent=1 // pred_fallthru
      _
    // Predicated region
    $region30: #{decoder_forward.1} parent=1 // pred_check
      _
    $region31: #{decoder_forward.1} parent=1 // pred_check_branch
      %30 = sbr.rel (0) target = $region33
    $region32: #{decoder_forward.1} parent=1 // pred_region
      _
    $region33: #{decoder_forward.1} parent=1 // pred_fallthru
      _
    // Predicated region
    $region34: #{decoder_forward.1} parent=1 // pred_check
      _
    $region35: #{decoder_forward.1} parent=1 // pred_check_branch
      %32 = sbr.rel (0) target = $region37
    $region36: #{decoder_forward.1} parent=1 // pred_region
      _
    $region37: #{decoder_forward.1} parent=1 // pred_fallthru
      _
    %v34 = vld [vmem:[%s0] sm:$0xff]
    %v35 = vld [vmem:[%s0 + $0x8] sm:$0xff]
    %v36 = vld [vmem:[%s0 + $0x10] sm:$0xff]
    %v37 = vld [vmem:[%s0 + $0x18] sm:$0xff]
    %v38 = vld [vmem:[%s0 + $0x20] sm:$0xff]
    %v39 = vld [vmem:[%s0 + $0x28] sm:$0xff]
    %v40 = vld [vmem:[%s0 + $0x30] sm:$0xff]
    %v41 = vld [vmem:[%s0 + $0x38] sm:$0xff]
    %v42 = vpack.c.bf16 %v35, %v34
    %v43 = vpack.c.bf16 %v37, %v36
    %v44 = vpack.c.bf16 %v39, %v38
    %v45 = vpack.c.bf16 %v41, %v40
    %v46 = vld [vmem:[%s1] sm:$0xf]
    %v47 = vld [vmem:[%s1 + $0x4] sm:$0xf]
    %v48 = vld [vmem:[%s2] sm:$0x1]
    %v50 = vlaneseq
    %v51 = vshrl.u32 %v50, 7
    %v52 = vsub.s32 0, %v51
    %v53 = vrot.slane %v48, %v52
    %v57 = vunpack.c.l.b16 %v46
    %v58 = vunpack.c.l.b16 %v47
    %v59 = vpack.c.b16 %v58, %v57
    %vm61 = vcmask 130048
    %v63 = vsel %vm61, %v42, 0
    %v66 = vsel %vm61, %v43, 0
    %v69 = vsel %vm61, %v44, 0
    %v72 = vsel %vm61, %v45, 0
    %74 = vmatprep.subr.bf16.mxu0 0
    %75 = vmatpush1.bf16.msra.mxu0 %v59
    %76 = vmatprep.subr.bf16.mxu0 0
    %77 = vmatpush1.bf16.msra.mxu0 0
    %78 = vmatprep.subr.bf16.mxu0 0
    %79 = vmatpush1.bf16.msra.mxu0 0
    %80 = vmatprep.subr.bf16.mxu0 0
    %81 = vmatpush1.bf16.msra.mxu0 0
    %82 = vmatprep.subr.bf16.mxu0 0
    %83 = vmatpush1.bf16.msra.mxu0 0
    %84 = vmatprep.subr.bf16.mxu0 0
    %85 = vmatpush1.bf16.msra.mxu0 0
    %86 = vmatprep.subr.bf16.mxu0 0
    %87 = vmatpush1.bf16.msra.mxu0 0
    %88 = vmatprep.subr.bf16.mxu0 0
    %89 = vmatpush1.bf16.msra.mxu0 0
    %90 = vmatprep.subr.bf16.mxu0 0
    %91 = vmatpush1.bf16.msra.mxu0 0
    %92 = vmatprep.subr.bf16.mxu0 0
    %93 = vmatpush1.bf16.msra.mxu0 0
    %94 = vmatprep.subr.bf16.mxu0 0
    %95 = vmatpush1.bf16.msra.mxu0 0
    %96 = vmatprep.subr.bf16.mxu0 0
    %97 = vmatpush1.bf16.msra.mxu0 0
    %98 = vmatprep.subr.bf16.mxu0 0
    %99 = vmatpush1.bf16.msra.mxu0 0
    %100 = vmatprep.subr.bf16.mxu0 0
    %101 = vmatpush1.bf16.msra.mxu0 0
    %102 = vmatprep.subr.bf16.mxu0 0
    %103 = vmatpush1.bf16.msra.mxu0 0
    %104 = vmatprep.subr.bf16.mxu0 0
    %105 = vmatpush1.bf16.msra.mxu0 0
    %106 = vmatprep.mubr.bf16.mxu0 0
    %107 = vmatmul.mubr.bf16.gmra.mrb[0].mxu0 %v63
    %v108 = vpop.f32.mrb[0].mxu0
    %v109 = vadd.f32 %v53, %v108
    %v110 = vpop.f32.mrb[0].mxu0
    %v111 = vpop.f32.mrb[0].mxu0
    %v112 = vadd.f32 %v53, %v111
    %v113 = vpop.f32.mrb[0].mxu0
    %114 = vmatprep.mubr.bf16.mxu0 0
    %115 = vmatmul.mubr.bf16.gmra.mrb[0].mxu0 %v66
    %v116 = vpop.f32.mrb[0].mxu0
    %v117 = vadd.f32 %v53, %v116
    %v118 = vpop.f32.mrb[0].mxu0
    %v119 = vpop.f32.mrb[0].mxu0
    %v120 = vadd.f32 %v53, %v119
    %v121 = vpop.f32.mrb[0].mxu0
    %122 = vmatprep.mubr.bf16.mxu0 0
    %123 = vmatmul.mubr.bf16.gmra.mrb[0].mxu0 %v69
    %v124 = vpop.f32.mrb[0].mxu0
    %v125 = vadd.f32 %v53, %v124
    %v126 = vpop.f32.mrb[0].mxu0
    %v127 = vpop.f32.mrb[0].mxu0
    %v128 = vadd.f32 %v53, %v127
    %v129 = vpop.f32.mrb[0].mxu0
    %130 = vmatprep.mubr.bf16.mxu0 0
    %131 = vmatmul.mubr.bf16.gmra.mrb[0].mxu0 %v72
    %v132 = vpop.f32.mrb[0].mxu0
    %v133 = vadd.f32 %v53, %v132
    %v134 = vpop.f32.mrb[0].mxu0
    %v135 = vpop.f32.mrb[0].mxu0
    %v136 = vadd.f32 %v53, %v135
    %v137 = vpop.f32.mrb[0].mxu0
    %138 = vdwg.mxu0
    %v139 = vmax.f32 %v109, 0.0
    %v140 = vmax.f32 %v112, 0.0
    %v141 = vmax.f32 %v117, 0.0
    %v142 = vmax.f32 %v120, 0.0
    %v143 = vmax.f32 %v125, 0.0
    %v144 = vmax.f32 %v128, 0.0
    %v145 = vmax.f32 %v133, 0.0
    %v146 = vmax.f32 %v136, 0.0
    %v147 = vpack.c.bf16 %v140, %v139
    %v148 = vpack.c.bf16 %v142, %v141
    %v149 = vpack.c.bf16 %v144, %v143
    %v150 = vpack.c.bf16 %v146, %v145
    %v151 = vld [vmem:[%s3] sm:$0xf]
    %v152 = vld [vmem:[%s3 + $0x4] sm:$0xf]
    %v153 = vld [vmem:[%s3 + $0x8] sm:$0xf]
    %v154 = vld [vmem:[%s3 + $0xc] sm:$0xf]
    %v155 = vld [vmem:[%s3 + $0x10] sm:$0xf]
    %v156 = vld [vmem:[%s3 + $0x14] sm:$0xf]
    %v157 = vld [vmem:[%s3 + $0x18] sm:$0xf]
    %v158 = vld [vmem:[%s3 + $0x1c] sm:$0xf]
    %v159 = vld [vmem:[%s3 + $0x20] sm:$0xf]
    %v160 = vld [vmem:[%s3 + $0x24] sm:$0xf]
    %v161 = vld [vmem:[%s3 + $0x28] sm:$0xf]
    %v162 = vld [vmem:[%s3 + $0x2c] sm:$0xf]
    %v163 = vld [vmem:[%s3 + $0x30] sm:$0xf]
    %v164 = vld [vmem:[%s3 + $0x34] sm:$0xf]
    %v165 = vld [vmem:[%s3 + $0x38] sm:$0xf]
    %v166 = vld [vmem:[%s3 + $0x3c] sm:$0xf]
    %v167 = vld [vmem:[%s4] sm:$0x1]
    %v169 = vlaneseq
    %v170 = vshrl.u32 %v169, 7
    %v171 = vsub.s32 0, %v170
    %v172 = vrot.slane %v167, %v171
    %v190 = vunpack.c.l.b16 %v151
    %v191 = vunpack.c.l.b16 %v152
    %v192 = vunpack.c.l.b16 %v153
    %v193 = vunpack.c.l.b16 %v154
    %v194 = vunpack.c.l.b16 %v155
    %v195 = vunpack.c.l.b16 %v156
    %v196 = vunpack.c.l.b16 %v157
    %v197 = vunpack.c.l.b16 %v158
    %v198 = vunpack.c.l.b16 %v159
    %v199 = vunpack.c.l.b16 %v160
    %v200 = vunpack.c.l.b16 %v161
    %v201 = vunpack.c.l.b16 %v162
    %v202 = vunpack.c.l.b16 %v163
    %v203 = vunpack.c.l.b16 %v164
    %v204 = vunpack.c.l.b16 %v165
    %v205 = vunpack.c.l.b16 %v166
    %v206 = vpack.c.b16 %v191, %v190
    %v207 = vpack.c.b16 %v193, %v192
    %v208 = vpack.c.b16 %v195, %v194
    %v209 = vpack.c.b16 %v197, %v196
    %v210 = vpack.c.b16 %v199, %v198
    %v211 = vpack.c.b16 %v201, %v200
    %v212 = vpack.c.b16 %v203, %v202
    %v213 = vpack.c.b16 %v205, %v204
    %222 = vmatprep.subr.bf16.mxu0 0
    %223 = vmatpush1.bf16.msra.mxu0 %v206
    %224 = vmatprep.subr.bf16.mxu0 0
    %225 = vmatpush1.bf16.msra.mxu0 %v207
    %226 = vmatprep.subr.bf16.mxu0 0
    %227 = vmatpush1.bf16.msra.mxu0 %v208
    %228 = vmatprep.subr.bf16.mxu0 0
    %229 = vmatpush1.bf16.msra.mxu0 %v209
    %230 = vmatprep.subr.bf16.mxu0 0
    %231 = vmatpush1.bf16.msra.mxu0 %v210
    %232 = vmatprep.subr.bf16.mxu0 0
    %233 = vmatpush1.bf16.msra.mxu0 %v211
    %234 = vmatprep.subr.bf16.mxu0 0
    %235 = vmatpush1.bf16.msra.mxu0 %v212
    %236 = vmatprep.subr.bf16.mxu0 0
    %237 = vmatpush1.bf16.msra.mxu0 %v213
    %238 = vmatprep.subr.bf16.mxu0 0
    %239 = vmatpush1.bf16.msra.mxu0 0
    %240 = vmatprep.subr.bf16.mxu0 0
    %241 = vmatpush1.bf16.msra.mxu0 0
    %242 = vmatprep.subr.bf16.mxu0 0
    %243 = vmatpush1.bf16.msra.mxu0 0
    %244 = vmatprep.subr.bf16.mxu0 0
    %245 = vmatpush1.bf16.msra.mxu0 0
    %246 = vmatprep.subr.bf16.mxu0 0
    %247 = vmatpush1.bf16.msra.mxu0 0
    %248 = vmatprep.subr.bf16.mxu0 0
    %249 = vmatpush1.bf16.msra.mxu0 0
    %250 = vmatprep.subr.bf16.mxu0 0
    %251 = vmatpush1.bf16.msra.mxu0 0
    %252 = vmatprep.subr.bf16.mxu0 0
    %253 = vmatpush1.bf16.msra.mxu0 0
    %254 = vmatprep.mubr.bf16.mxu0 0
    %255 = vmatmul.mubr.bf16.gmra.mrb[0].mxu0 %v147
    %v256 = vpop.f32.mrb[0].mxu0
    %v257 = vadd.f32 %v172, %v256
    %v258 = vpop.f32.mrb[0].mxu0
    %v259 = vpop.f32.mrb[0].mxu0
    %v260 = vadd.f32 %v172, %v259
    %v261 = vpop.f32.mrb[0].mxu0
    %262 = vmatprep.mubr.bf16.mxu0 0
    %263 = vmatmul.mubr.bf16.gmra.mrb[0].mxu0 %v148
    %v264 = vpop.f32.mrb[0].mxu0
    %v265 = vadd.f32 %v172, %v264
    %v266 = vpop.f32.mrb[0].mxu0
    %v267 = vpop.f32.mrb[0].mxu0
    %v268 = vadd.f32 %v172, %v267
    %v269 = vpop.f32.mrb[0].mxu0
    %270 = vmatprep.mubr.bf16.mxu0 0
    %271 = vmatmul.mubr.bf16.gmra.mrb[0].mxu0 %v149
    %v272 = vpop.f32.mrb[0].mxu0
    %v273 = vadd.f32 %v172, %v272
    %v274 = vpop.f32.mrb[0].mxu0
    %v275 = vpop.f32.mrb[0].mxu0
    %v276 = vadd.f32 %v172, %v275
    %v277 = vpop.f32.mrb[0].mxu0
    %278 = vmatprep.mubr.bf16.mxu0 0
    %279 = vmatmul.mubr.bf16.gmra.mrb[0].mxu0 %v150
    %v280 = vpop.f32.mrb[0].mxu0
    %v281 = vadd.f32 %v172, %v280
    %v282 = vpop.f32.mrb[0].mxu0
    %v283 = vpop.f32.mrb[0].mxu0
    %v284 = vadd.f32 %v172, %v283
    %v285 = vpop.f32.mrb[0].mxu0
    %286 = vdwg.mxu0
    %v287 = vmax.f32 %v257, 0.0
    %v288 = vmax.f32 %v260, 0.0
    %v289 = vmax.f32 %v265, 0.0
    %v290 = vmax.f32 %v268, 0.0
    %v291 = vmax.f32 %v273, 0.0
    %v292 = vmax.f32 %v276, 0.0
    %v293 = vmax.f32 %v281, 0.0
    %v294 = vmax.f32 %v284, 0.0
    %v295 = vpack.c.bf16 %v288, %v287
    %v296 = vpack.c.bf16 %v290, %v289
    %v297 = vpack.c.bf16 %v292, %v291
    %v298 = vpack.c.bf16 %v294, %v293
    %v299 = vld [vmem:[%s5] sm:$0xf]
    %v300 = vld [vmem:[%s5 + $0x4] sm:$0xf]
    %v301 = vld [vmem:[%s5 + $0x8] sm:$0xf]
    %v302 = vld [vmem:[%s5 + $0xc] sm:$0xf]
    %v303 = vld [vmem:[%s5 + $0x10] sm:$0xf]
    %v304 = vld [vmem:[%s5 + $0x14] sm:$0xf]
    %v305 = vld [vmem:[%s5 + $0x18] sm:$0xf]
    %v306 = vld [vmem:[%s5 + $0x1c] sm:$0xf]
    %v307 = vld [vmem:[%s5 + $0x20] sm:$0xf]
    %v308 = vld [vmem:[%s5 + $0x24] sm:$0xf]
    %v309 = vld [vmem:[%s5 + $0x28] sm:$0xf]
    %v310 = vld [vmem:[%s5 + $0x2c] sm:$0xf]
    %v311 = vld [vmem:[%s5 + $0x30] sm:$0xf]
    %v312 = vld [vmem:[%s5 + $0x34] sm:$0xf]
    %v313 = vld [vmem:[%s5 + $0x38] sm:$0xf]
    %v314 = vld [vmem:[%s5 + $0x3c] sm:$0xf]
    %v315 = vld [vmem:[%s6] sm:$0x1]
    %v317 = vlaneseq
    %v318 = vshrl.u32 %v317, 7
    %v319 = vsub.s32 0, %v318
    %v320 = vrot.slane %v315, %v319
    %v338 = vunpack.c.l.b16 %v299
    %v339 = vunpack.c.l.b16 %v300
    %v340 = vunpack.c.l.b16 %v301
    %v341 = vunpack.c.l.b16 %v302
    %v342 = vunpack.c.l.b16 %v303
    %v343 = vunpack.c.l.b16 %v304
    %v344 = vunpack.c.l.b16 %v305
    %v345 = vunpack.c.l.b16 %v306
    %v346 = vunpack.c.l.b16 %v307
    %v347 = vunpack.c.l.b16 %v308
    %v348 = vunpack.c.l.b16 %v309
    %v349 = vunpack.c.l.b16 %v310
    %v350 = vunpack.c.l.b16 %v311
    %v351 = vunpack.c.l.b16 %v312
    %v352 = vunpack.c.l.b16 %v313
    %v353 = vunpack.c.l.b16 %v314
    %v354 = vpack.c.b16 %v339, %v338
    %v355 = vpack.c.b16 %v341, %v340
    %v356 = vpack.c.b16 %v343, %v342
    %v357 = vpack.c.b16 %v345, %v344
    %v358 = vpack.c.b16 %v347, %v346
    %v359 = vpack.c.b16 %v349, %v348
    %v360 = vpack.c.b16 %v351, %v350
    %v361 = vpack.c.b16 %v353, %v352
    %370 = vmatprep.subr.bf16.mxu0 0
    %371 = vmatpush1.bf16.msra.mxu0 %v354
    %372 = vmatprep.subr.bf16.mxu0 0
    %373 = vmatpush1.bf16.msra.mxu0 %v355
    %374 = vmatprep.subr.bf16.mxu0 0
    %375 = vmatpush1.bf16.msra.mxu0 %v356
    %376 = vmatprep.subr.bf16.mxu0 0
    %377 = vmatpush1.bf16.msra.mxu0 %v357
    %378 = vmatprep.subr.bf16.mxu0 0
    %379 = vmatpush1.bf16.msra.mxu0 %v358
    %380 = vmatprep.subr.bf16.mxu0 0
    %381 = vmatpush1.bf16.msra.mxu0 %v359
    %382 = vmatprep.subr.bf16.mxu0 0
    %383 = vmatpush1.bf16.msra.mxu0 %v360
    %384 = vmatprep.subr.bf16.mxu0 0
    %385 = vmatpush1.bf16.msra.mxu0 %v361
    %386 = vmatprep.subr.bf16.mxu0 0
    %387 = vmatpush1.bf16.msra.mxu0 0
    %388 = vmatprep.subr.bf16.mxu0 0
    %389 = vmatpush1.bf16.msra.mxu0 0
    %390 = vmatprep.subr.bf16.mxu0 0
    %391 = vmatpush1.bf16.msra.mxu0 0
    %392 = vmatprep.subr.bf16.mxu0 0
    %393 = vmatpush1.bf16.msra.mxu0 0
    %394 = vmatprep.subr.bf16.mxu0 0
    %395 = vmatpush1.bf16.msra.mxu0 0
    %396 = vmatprep.subr.bf16.mxu0 0
    %397 = vmatpush1.bf16.msra.mxu0 0
    %398 = vmatprep.subr.bf16.mxu0 0
    %399 = vmatpush1.bf16.msra.mxu0 0
    %400 = vmatprep.subr.bf16.mxu0 0
    %401 = vmatpush1.bf16.msra.mxu0 0
    %402 = vmatprep.mubr.bf16.mxu0 0
    %403 = vmatmul.mubr.bf16.gmra.mrb[0].mxu0 %v295
    %v404 = vpop.f32.mrb[0].mxu0
    %v405 = vadd.f32 %v320, %v404
    %v406 = vpop.f32.mrb[0].mxu0
    %v407 = vpop.f32.mrb[0].mxu0
    %v408 = vadd.f32 %v320, %v407
    %v409 = vpop.f32.mrb[0].mxu0
    %410 = vmatprep.mubr.bf16.mxu0 0
    %411 = vmatmul.mubr.bf16.gmra.mrb[0].mxu0 %v296
    %v412 = vpop.f32.mrb[0].mxu0
    %v413 = vadd.f32 %v320, %v412
    %v414 = vpop.f32.mrb[0].mxu0
    %v415 = vpop.f32.mrb[0].mxu0
    %v416 = vadd.f32 %v320, %v415
    %v417 = vpop.f32.mrb[0].mxu0
    %418 = vmatprep.mubr.bf16.mxu0 0
    %419 = vmatmul.mubr.bf16.gmra.mrb[0].mxu0 %v297
    %v420 = vpop.f32.mrb[0].mxu0
    %v421 = vadd.f32 %v320, %v420
    %v422 = vpop.f32.mrb[0].mxu0
    %v423 = vpop.f32.mrb[0].mxu0
    %v424 = vadd.f32 %v320, %v423
    %v425 = vpop.f32.mrb[0].mxu0
    %426 = vmatprep.mubr.bf16.mxu0 0
    %427 = vmatmul.mubr.bf16.gmra.mrb[0].mxu0 %v298
    %v428 = vpop.f32.mrb[0].mxu0
    %v429 = vadd.f32 %v320, %v428
    %v430 = vpop.f32.mrb[0].mxu0
    %v431 = vpop.f32.mrb[0].mxu0
    %v432 = vadd.f32 %v320, %v431
    %v433 = vpop.f32.mrb[0].mxu0
    %434 = vdwg.mxu0
    %v435 = vmax.f32 %v405, 0.0
    %v436 = vmax.f32 %v408, 0.0
    %v437 = vmax.f32 %v413, 0.0
    %v438 = vmax.f32 %v416, 0.0
    %v439 = vmax.f32 %v421, 0.0
    %v440 = vmax.f32 %v424, 0.0
    %v441 = vmax.f32 %v429, 0.0
    %v442 = vmax.f32 %v432, 0.0
    %v443 = vpack.c.bf16 %v436, %v435
    %v444 = vpack.c.bf16 %v438, %v437
    %v445 = vpack.c.bf16 %v440, %v439
    %v446 = vpack.c.bf16 %v442, %v441
    %v447 = vld [vmem:[%s7] sm:$0xf]
    %v448 = vld [vmem:[%s7 + $0x4] sm:$0xf]
    %v449 = vld [vmem:[%s7 + $0x8] sm:$0xf]
    %v450 = vld [vmem:[%s7 + $0xc] sm:$0xf]
    %v451 = vld [vmem:[%s7 + $0x10] sm:$0xf]
    %v452 = vld [vmem:[%s7 + $0x14] sm:$0xf]
    %v453 = vld [vmem:[%s7 + $0x18] sm:$0xf]
    %v454 = vld [vmem:[%s7 + $0x1c] sm:$0xf]
    %v455 = vld [vmem:[%s7 + $0x20] sm:$0xf]
    %v456 = vld [vmem:[%s7 + $0x24] sm:$0xf]
    %v457 = vld [vmem:[%s7 + $0x28] sm:$0xf]
    %v458 = vld [vmem:[%s7 + $0x2c] sm:$0xf]
    %v459 = vld [vmem:[%s7 + $0x30] sm:$0xf]
    %v460 = vld [vmem:[%s7 + $0x34] sm:$0xf]
    %v461 = vld [vmem:[%s7 + $0x38] sm:$0xf]
    %v462 = vld [vmem:[%s7 + $0x3c] sm:$0xf]
    %v463 = vld [vmem:[%s8] sm:$0x1]
    %v465 = vlaneseq
    %v466 = vshrl.u32 %v465, 7
    %v467 = vsub.s32 0, %v466
    %v468 = vrot.slane %v463, %v467
    %v486 = vunpack.c.l.b16 %v447
    %v487 = vunpack.c.l.b16 %v448
    %v488 = vunpack.c.l.b16 %v449
    %v489 = vunpack.c.l.b16 %v450
    %v490 = vunpack.c.l.b16 %v451
    %v491 = vunpack.c.l.b16 %v452
    %v492 = vunpack.c.l.b16 %v453
    %v493 = vunpack.c.l.b16 %v454
    %v494 = vunpack.c.l.b16 %v455
    %v495 = vunpack.c.l.b16 %v456
    %v496 = vunpack.c.l.b16 %v457
    %v497 = vunpack.c.l.b16 %v458
    %v498 = vunpack.c.l.b16 %v459
    %v499 = vunpack.c.l.b16 %v460
    %v500 = vunpack.c.l.b16 %v461
    %v501 = vunpack.c.l.b16 %v462
    %v502 = vpack.c.b16 %v487, %v486
    %v503 = vpack.c.b16 %v489, %v488
    %v504 = vpack.c.b16 %v491, %v490
    %v505 = vpack.c.b16 %v493, %v492
    %v506 = vpack.c.b16 %v495, %v494
    %v507 = vpack.c.b16 %v497, %v496
    %v508 = vpack.c.b16 %v499, %v498
    %v509 = vpack.c.b16 %v501, %v500
    %518 = vmatprep.subr.bf16.mxu0 0
    %519 = vmatpush1.bf16.msra.mxu0 %v502
    %520 = vmatprep.subr.bf16.mxu0 0
    %521 = vmatpush1.bf16.msra.mxu0 %v503
    %522 = vmatprep.subr.bf16.mxu0 0
    %523 = vmatpush1.bf16.msra.mxu0 %v504
    %524 = vmatprep.subr.bf16.mxu0 0
    %525 = vmatpush1.bf16.msra.mxu0 %v505
    %526 = vmatprep.subr.bf16.mxu0 0
    %527 = vmatpush1.bf16.msra.mxu0 %v506
    %528 = vmatprep.subr.bf16.mxu0 0
    %529 = vmatpush1.bf16.msra.mxu0 %v507
    %530 = vmatprep.subr.bf16.mxu0 0
    %531 = vmatpush1.bf16.msra.mxu0 %v508
    %532 = vmatprep.subr.bf16.mxu0 0
    %533 = vmatpush1.bf16.msra.mxu0 %v509
    %534 = vmatprep.subr.bf16.mxu0 0
    %535 = vmatpush1.bf16.msra.mxu0 0
    %536 = vmatprep.subr.bf16.mxu0 0
    %537 = vmatpush1.bf16.msra.mxu0 0
    %538 = vmatprep.subr.bf16.mxu0 0
    %539 = vmatpush1.bf16.msra.mxu0 0
    %540 = vmatprep.subr.bf16.mxu0 0
    %541 = vmatpush1.bf16.msra.mxu0 0
    %542 = vmatprep.subr.bf16.mxu0 0
    %543 = vmatpush1.bf16.msra.mxu0 0
    %544 = vmatprep.subr.bf16.mxu0 0
    %545 = vmatpush1.bf16.msra.mxu0 0
    %546 = vmatprep.subr.bf16.mxu0 0
    %547 = vmatpush1.bf16.msra.mxu0 0
    %548 = vmatprep.subr.bf16.mxu0 0
    %549 = vmatpush1.bf16.msra.mxu0 0
    %550 = vmatprep.mubr.bf16.mxu0 0
    %551 = vmatmul.mubr.bf16.gmra.mrb[0].mxu0 %v443
    %v552 = vpop.f32.mrb[0].mxu0
    %v553 = vadd.f32 %v468, %v552
    %v554 = vpop.f32.mrb[0].mxu0
    %v555 = vpop.f32.mrb[0].mxu0
    %v556 = vadd.f32 %v468, %v555
    %v557 = vpop.f32.mrb[0].mxu0
    %558 = vmatprep.mubr.bf16.mxu0 0
    %559 = vmatmul.mubr.bf16.gmra.mrb[0].mxu0 %v444
    %v560 = vpop.f32.mrb[0].mxu0
    %v561 = vadd.f32 %v468, %v560
    %v562 = vpop.f32.mrb[0].mxu0
    %v563 = vpop.f32.mrb[0].mxu0
    %v564 = vadd.f32 %v468, %v563
    %v565 = vpop.f32.mrb[0].mxu0
    %566 = vmatprep.mubr.bf16.mxu0 0
    %567 = vmatmul.mubr.bf16.gmra.mrb[0].mxu0 %v445
    %v568 = vpop.f32.mrb[0].mxu0
    %v569 = vadd.f32 %v468, %v568
    %v570 = vpop.f32.mrb[0].mxu0
    %v571 = vpop.f32.mrb[0].mxu0
    %v572 = vadd.f32 %v468, %v571
    %v573 = vpop.f32.mrb[0].mxu0
    %574 = vmatprep.mubr.bf16.mxu0 0
    %575 = vmatmul.mubr.bf16.gmra.mrb[0].mxu0 %v446
    %v576 = vpop.f32.mrb[0].mxu0
    %v577 = vadd.f32 %v468, %v576
    %v578 = vpop.f32.mrb[0].mxu0
    %v579 = vpop.f32.mrb[0].mxu0
    %v580 = vadd.f32 %v468, %v579
    %v581 = vpop.f32.mrb[0].mxu0
    %582 = vdwg.mxu0
    %583 = vst [vmem:[#allocation2] sm:$0xff] %v553
    %584 = vst [vmem:[#allocation2 + $0x8] sm:$0xff] %v556
    %585 = vst [vmem:[#allocation2 + $0x10] sm:$0xff] %v561
    %586 = vst [vmem:[#allocation2 + $0x18] sm:$0xff] %v564
    %587 = vst [vmem:[#allocation2 + $0x20] sm:$0xff] %v569
    %588 = vst [vmem:[#allocation2 + $0x28] sm:$0xff] %v572
    %589 = vst [vmem:[#allocation2 + $0x30] sm:$0xff] %v577
    %590 = vst [vmem:[#allocation2 + $0x38] sm:$0xff] %v580
    // Predicated region
    $region38: #{decoder_forward.1} parent=1 // pred_check
      _
    $region39: #{decoder_forward.1} parent=1 // pred_check_branch
      %592 = sbr.rel (0) target = $region41
    $region40: #{decoder_forward.1} parent=1 // pred_region
      %s594 = ssub.s32 1024, 1024
      %595 = vsyncadd [#allocation3], %s594
      %s596 = sshll.u32 [#allocation2], 4
      %s597 = int_to_ptr.vmem [resolvable:$true] %s596
      %602 = dma.vmem_to_hbm [thread:$0]  %s597, 1024, %s9, [#allocation3], 128, 128, 8
    $region41: #{decoder_forward.1} parent=1 // pred_fallthru
      _
    // Predicated region
    $region42: #{decoder_forward.1} parent=1 // pred_check
      _
    $region43: #{decoder_forward.1} parent=1 // pred_check_branch
      %604 = sbr.rel (0) target = $region45
    $region44: #{decoder_forward.1} parent=1 // pred_region
      %605 = dma.done [#allocation3], 1024
    $region45: #{decoder_forward.1} parent=1 // pred_fallthru
      _
    %606 = vsyncpa [#allocation3], 1

</llo_original>
